<compile_context>
chip_gen: v6e
topology: v6e:2x2x1
jax: 0.10.0
libtpu: 0.0.40
codegen_flags: <defaults>
</compile_context>

<pallas_src>
import math

import jax
import jax.numpy as jnp
from jax.experimental import pallas as pl
from jax.experimental.pallas import tpu as pltpu

_INV_SQRT2 = 1.0 / math.sqrt(2.0)


def _gelu_exact(y):
    """Exact (erf-based) GELU == PyTorch nn.GELU() default."""
    return 0.5 * y * (1.0 + jax.lax.erf(y * _INV_SQRT2))


def _make_fused_mlp_kernel(n_layers):
    """Builds a kernel computing n_layers of (x @ W + b -> GELU) in one pass."""

    def kernel(*refs):
        # refs = (x_ref, w0_ref, b0_ref, w1_ref, b1_ref, ..., o_ref)
        x_ref, o_ref = refs[0], refs[-1]
        in_dtype = x_ref.dtype
        h = x_ref[...]
        for l in range(n_layers):
            w = refs[1 + 2 * l][...]
            b = refs[2 + 2 * l][...]                 # (1, N) broadcasts over rows
            # Native-dtype operands on the MXU, f32 accumulation.
            y = jnp.dot(h, w, preferred_element_type=jnp.float32)
            y = y + b.astype(jnp.float32)
            # GELU in f32, then back to the streaming dtype so the next matmul
            # stays on the fast MXU path (no-op when inputs are f32).
            h = _gelu_exact(y).astype(in_dtype)
        o_ref[...] = h.astype(o_ref.dtype)

    return kernel


def mlp_head_forward(x, params, *, block_m=512):
    """x: (M, K).  params: list of (w(in,out), b(1,out)).  Returns (M, N_last)."""
    M, K = x.shape
    n_layers = len(params)
    assert n_layers >= 1
    n_out = params[-1][0].shape[1]

    # ---- M tiling: only the batch axis is tiled; weights stay resident -----
    tm = M if M <= block_m else block_m              # block_m is a multiple of 8

    # ---- Lane-dense final output: pad N up to a multiple of 128 ------------
    n_pad = n_out if n_out % 128 == 0 else ((n_out // 128) + 1) * 128

    flat_args = [x]
    in_specs = [pl.BlockSpec((tm, K), lambda i: (i, 0))]
    for li, (w, b) in enumerate(params):
        k_in, n_lay = w.shape
        if li == n_layers - 1 and n_pad != n_out:
            # Zero-pad the last layer's columns: padded lanes compute
            # GELU(0) = 0 and are sliced away below.  Keeps stores unmasked.
            w = jnp.pad(w, ((0, 0), (0, n_pad - n_out)))
            b = jnp.pad(b, ((0, 0), (0, n_pad - n_out)))
            n_lay = n_pad
        flat_args += [w, b]
        in_specs += [
            pl.BlockSpec((k_in, n_lay), lambda i: (0, 0)),   # VMEM-resident
            pl.BlockSpec((1, n_lay), lambda i: (0, 0)),
        ]

    # ---- VMEM budget: double-buffered inputs/outputs + f32 intermediates ----
    itemsize = jnp.dtype(x.dtype).itemsize
    w_bytes = sum(int(a.size) * a.dtype.itemsize for a in flat_args[1:])
    io_bytes = tm * (K + n_pad) * itemsize
    widths = [K, n_pad] + [w.shape[1] for w, _ in params]
    act_bytes = tm * max(widths) * 4
    est = 2 * (w_bytes + io_bytes) + 4 * act_bytes
    vmem_limit = int(min(max(2 * est, 16 << 20), 48 << 20))  # fits v7x's 64 MiB

    out_padded = pl.pallas_call(
        _make_fused_mlp_kernel(n_layers),
        out_shape=jax.ShapeDtypeStruct((M, n_pad), x.dtype),
        grid_spec=pl.GridSpec(
            grid=(pl.cdiv(M, tm),),
            in_specs=in_specs,
            out_specs=pl.BlockSpec((tm, n_pad), lambda i: (i, 0)),
        ),
        compiler_params=pltpu.CompilerParams(
            dimension_semantics=("parallel",),     # megacore-shard M on v7x
            vmem_limit_bytes=vmem_limit,
        ),
    )(*flat_args)

    return out_padded[:, :n_out] if n_pad != n_out else out_padded


@jax.jit
def mlp_head_apply(x, params):
    return mlp_head_forward(x, params)


def init_mlp_head_params(key, sizes):
    """PyTorch nn.Linear-style init: weight, bias ~ U(-1/sqrt(fan_in), +).
    Weights stored pre-transposed as (in, out); biases pre-shaped as (1, out)."""
    params = []
    for i in range(len(sizes) - 1):
        fan_in, fan_out = sizes[i], sizes[i + 1]
        key, kw, kb = jax.random.split(key, 3)
        bound = 1.0 / math.sqrt(fan_in)
        w = jax.random.uniform(kw, (fan_in, fan_out), jnp.float32, -bound, bound)
        b = jax.random.uniform(kb, (1, fan_out), jnp.float32, -bound, bound)
        params.append((w, b))
    return params


def mlp_head_reference(x, params):
    """Pure-JAX reference for sanity checking."""
    for w, b in params:
        x = _gelu_exact(x @ w + b)
    return x


if __name__ == "__main__":
    sizes = [32, 64, 16]   # MLPHead(sizes): Linear(32,64)+GELU, Linear(64,16)+GELU
    batch = 8

    key = jax.random.PRNGKey(0)
    key, kx = jax.random.split(key)
    x = jax.random.normal(kx, (batch, sizes[0]), jnp.float32)
    params = init_mlp_head_params(key, sizes)

    out = jax.block_until_ready(mlp_head_apply(x, params))

    ref = mlp_head_reference(x, params)
    assert out.shape == (batch, sizes[-1])
    assert jnp.allclose(out, ref, atol=1e-5, rtol=1e-5), "mismatch vs reference"

    print("KERNEL_OK")
</pallas_src>

<mosaic_0001>
module attributes {stable_mosaic.version = 11 : i64} {
  func.func @kernel(%arg0: i32, %arg1: memref<8x32xf32, #tpu.memory_space<vmem>>, %arg2: memref<32x64xf32, #tpu.memory_space<vmem>>, %arg3: memref<1x64xf32, #tpu.memory_space<vmem>>, %arg4: memref<64x128xf32, #tpu.memory_space<vmem>>, %arg5: memref<1x128xf32, #tpu.memory_space<vmem>>, %arg6: memref<8x128xf32, #tpu.memory_space<vmem>>) attributes {dimension_semantics = [#tpu.dimension_semantics<parallel>], iteration_bounds = array<i64: 1>, scalar_prefetch = 0 : i64, scratch_operands = 0 : i64, tpu.core_type = #tpu.core_type<tc>, window_params = [{transform_indices = @transform_0, window_bounds = array<i64: 8, 32>}, {pipeline_mode = #tpu.pipeline_mode<synchronous>, transform_indices = @transform_1, window_bounds = array<i64: 32, 64>}, {pipeline_mode = #tpu.pipeline_mode<synchronous>, transform_indices = @transform_2, window_bounds = array<i64: 1, 64>}, {pipeline_mode = #tpu.pipeline_mode<synchronous>, transform_indices = @transform_3, window_bounds = array<i64: 64, 128>}, {pipeline_mode = #tpu.pipeline_mode<synchronous>, transform_indices = @transform_4, window_bounds = array<i64: 1, 128>}, {transform_indices = @transform_5, window_bounds = array<i64: 8, 128>}]} {
    %c0 = arith.constant 0 : index
    %c0_0 = arith.constant 0 : index
    %0 = vector.load %arg1[%c0, %c0_0] : memref<8x32xf32, #tpu.memory_space<vmem>>, vector<8x32xf32>
    %c0_1 = arith.constant 0 : index
    %c0_2 = arith.constant 0 : index
    %1 = vector.load %arg2[%c0_1, %c0_2] : memref<32x64xf32, #tpu.memory_space<vmem>>, vector<32x64xf32>
    %c0_3 = arith.constant 0 : index
    %c0_4 = arith.constant 0 : index
    %2 = vector.load %arg3[%c0_3, %c0_4] : memref<1x64xf32, #tpu.memory_space<vmem>>, vector<1x64xf32>
    %cst = arith.constant dense<0.000000e+00> : vector<8x64xf32>
    %3 = tpu.matmul %0, %1, %cst {dimension_numbers = #tpu.dot_dimension_numbers<[1], [0], [0], [1], [0, 0, 1, 1], [], []>} : vector<8x32xf32>, vector<32x64xf32>, vector<8x64xf32> -> vector<8x64xf32>
    %4 = vector.broadcast %2 : vector<1x64xf32> to vector<8x64xf32>
    %5 = arith.addf %3, %4 : vector<8x64xf32>
    %cst_5 = arith.constant 5.000000e-01 : f32
    %6 = vector.broadcast %cst_5 : f32 to vector<8x64xf32>
    %7 = arith.mulf %6, %5 : vector<8x64xf32>
    %cst_6 = arith.constant 0.707106769 : f32
    %8 = vector.broadcast %cst_6 : f32 to vector<8x64xf32>
    %9 = arith.mulf %5, %8 : vector<8x64xf32>
    %10 = math.erf %9 : vector<8x64xf32>
    %cst_7 = arith.constant 1.000000e+00 : f32
    %11 = vector.broadcast %cst_7 : f32 to vector<8x64xf32>
    %12 = arith.addf %11, %10 : vector<8x64xf32>
    %13 = arith.mulf %7, %12 : vector<8x64xf32>
    %c0_8 = arith.constant 0 : index
    %c0_9 = arith.constant 0 : index
    %14 = vector.load %arg4[%c0_8, %c0_9] : memref<64x128xf32, #tpu.memory_space<vmem>>, vector<64x128xf32>
    %c0_10 = arith.constant 0 : index
    %c0_11 = arith.constant 0 : index
    %15 = vector.load %arg5[%c0_10, %c0_11] : memref<1x128xf32, #tpu.memory_space<vmem>>, vector<1x128xf32>
    %cst_12 = arith.constant dense<0.000000e+00> : vector<8x128xf32>
    %16 = tpu.matmul %13, %14, %cst_12 {dimension_numbers = #tpu.dot_dimension_numbers<[1], [0], [0], [1], [0, 0, 1, 1], [], []>} : vector<8x64xf32>, vector<64x128xf32>, vector<8x128xf32> -> vector<8x128xf32>
    %17 = vector.broadcast %15 : vector<1x128xf32> to vector<8x128xf32>
    %18 = arith.addf %16, %17 : vector<8x128xf32>
    %cst_13 = arith.constant 5.000000e-01 : f32
    %19 = vector.broadcast %cst_13 : f32 to vector<8x128xf32>
    %20 = arith.mulf %19, %18 : vector<8x128xf32>
    %cst_14 = arith.constant 0.707106769 : f32
    %21 = vector.broadcast %cst_14 : f32 to vector<8x128xf32>
    %22 = arith.mulf %18, %21 : vector<8x128xf32>
    %23 = math.erf %22 : vector<8x128xf32>
    %cst_15 = arith.constant 1.000000e+00 : f32
    %24 = vector.broadcast %cst_15 : f32 to vector<8x128xf32>
    %25 = arith.addf %24, %23 : vector<8x128xf32>
    %26 = arith.mulf %20, %25 : vector<8x128xf32>
    %c0_16 = arith.constant 0 : index
    %c0_17 = arith.constant 0 : index
    %27 = vector.load %arg6[%c0_16, %c0_17] : memref<8x128xf32, #tpu.memory_space<vmem>>, vector<8x128xf32>
    tpu.vector_store %arg6[%c0_16, %c0_17], %26 {strides = array<i32>} : memref<8x128xf32, #tpu.memory_space<vmem>>, vector<8x128xf32>,
    return
  }
  func.func @transform_0(%arg0: i32) -> (i32, i32) {
    %c0_i32 = arith.constant 0 : i32
    %c0_i32_0 = arith.constant 0 : i32
    return %arg0, %c0_i32 : i32, i32
  }
  func.func @transform_1(%arg0: i32) -> (i32, i32) {
    %c0_i32 = arith.constant 0 : i32
    %c0_i32_0 = arith.constant 0 : i32
    %c0_i32_1 = arith.constant 0 : i32
    return %c0_i32, %c0_i32_0 : i32, i32
  }
  func.func @transform_2(%arg0: i32) -> (i32, i32) {
    %c0_i32 = arith.constant 0 : i32
    %c0_i32_0 = arith.constant 0 : i32
    %c0_i32_1 = arith.constant 0 : i32
    return %c0_i32, %c0_i32_0 : i32, i32
  }
  func.func @transform_3(%arg0: i32) -> (i32, i32) {
    %c0_i32 = arith.constant 0 : i32
    %c0_i32_0 = arith.constant 0 : i32
    %c0_i32_1 = arith.constant 0 : i32
    return %c0_i32, %c0_i32_0 : i32, i32
  }
  func.func @transform_4(%arg0: i32) -> (i32, i32) {
    %c0_i32 = arith.constant 0 : i32
    %c0_i32_0 = arith.constant 0 : i32
    %c0_i32_1 = arith.constant 0 : i32
    return %c0_i32, %c0_i32_0 : i32, i32
  }
  func.func @transform_5(%arg0: i32) -> (i32, i32) {
    %c0_i32 = arith.constant 0 : i32
    %c0_i32_0 = arith.constant 0 : i32
    return %arg0, %c0_i32 : i32, i32
  }
}

</mosaic_0001>

<llo_original>
// kernel: mlp_head_apply.1
$region0: #{mlp_head_apply.1}
  #allocation0 [shape = 'u32[]', space=smem, size = 0x4, offset = 0x4, fixed_abs, tag = 'smem constant byte address 0x4 - core index']
  #allocation1 [shape = 'u32[144,128]{1,0:T(1,128)}', space=vmem, size = 0x12000, scoped, tag = 'internal scratch']
  %s0 = inlined_call_operand.vmem [shape: f32[8,32], index: 0, kind: input, shape index: {}]
  %s1 = inlined_call_operand.vmem [shape: f32[32,64], index: 1, kind: input, shape index: {}]
  %s2 = inlined_call_operand.vmem [shape: f32[1,64], index: 2, kind: input, shape index: {}]
  %s3 = inlined_call_operand.vmem [shape: f32[64,128], index: 3, kind: input, shape index: {}]
  %s4 = inlined_call_operand.vmem [shape: f32[1,128], index: 4, kind: input, shape index: {}]
  %s5 = inlined_call_operand.hbm [shape: f32[8,128], index: 5, kind: output, shape index: {}]
  %s6 = sld [smem:[#allocation0]]
  $region30: #{mlp_head_apply.1} parent=0
    _
  %s8 = ssub.s32 1, %s6
  %s9 = scalar_select 0, %s8, %s6
  $region1: #{mlp_head_apply.1} parent=0
    #allocation2 [shape = 'u8[4096]{0}', space=vmem, size = 0x1000, scoped, tag = 'output window, operand 0, single buffered']
    #allocation3 [shape = 's32[1]{0}', space=sflag, size = 0x4, scoped, tag = 'scoped memory for mlp_head_apply.1']
    %10 = vsyncpa [#allocation3], 0
    // Predicated region
    $region2: #{mlp_head_apply.1} parent=1 // pred_check
      _
    $region3: #{mlp_head_apply.1} parent=1 // pred_check_branch
      %12 = sbr.rel (0) target = $region5
    $region4: #{mlp_head_apply.1} parent=1 // pred_region
      _
    $region5: #{mlp_head_apply.1} parent=1 // pred_fallthru
      _
    // Predicated region
    $region6: #{mlp_head_apply.1} parent=1 // pred_check
      _
    $region7: #{mlp_head_apply.1} parent=1 // pred_check_branch
      %14 = sbr.rel (0) target = $region9
    $region8: #{mlp_head_apply.1} parent=1 // pred_region
      _
    $region9: #{mlp_head_apply.1} parent=1 // pred_fallthru
      _
    // Predicated region
    $region10: #{mlp_head_apply.1} parent=1 // pred_check
      _
    $region11: #{mlp_head_apply.1} parent=1 // pred_check_branch
      %16 = sbr.rel (0) target = $region13
    $region12: #{mlp_head_apply.1} parent=1 // pred_region
      _
    $region13: #{mlp_head_apply.1} parent=1 // pred_fallthru
      _
    // Predicated region
    $region14: #{mlp_head_apply.1} parent=1 // pred_check
      _
    $region15: #{mlp_head_apply.1} parent=1 // pred_check_branch
      %18 = sbr.rel (0) target = $region17
    $region16: #{mlp_head_apply.1} parent=1 // pred_region
      _
    $region17: #{mlp_head_apply.1} parent=1 // pred_fallthru
      _
    // Predicated region
    $region18: #{mlp_head_apply.1} parent=1 // pred_check
      _
    $region19: #{mlp_head_apply.1} parent=1 // pred_check_branch
      %20 = sbr.rel (0) target = $region21
    $region20: #{mlp_head_apply.1} parent=1 // pred_region
      _
    $region21: #{mlp_head_apply.1} parent=1 // pred_fallthru
      _
    %v21 = vld [vmem:[%s0] sm:$0xff]
    %v22 = vld [vmem:[%s1] sm:$0xff]
    %v23 = vld [vmem:[%s1 + $0x8] sm:$0xff]
    %v24 = vld [vmem:[%s1 + $0x10] sm:$0xff]
    %v25 = vld [vmem:[%s1 + $0x18] sm:$0xff]
    %v26 = vld [vmem:[%s2] sm:$0x1]
    %v28 = vlaneseq
    %v29 = vshrl.u32 %v28, 7
    %v30 = vsub.s32 0, %v29
    %v31 = vrot.slane %v26, %v30
    %vm33 = vcmask 261120
    %v35 = vsel %vm33, %v21, 0
    %37 = vmatprep.subr.mxu0 0.0
    %38 = vmatpush1.msra.mxu0 0.0
    %39 = vmatprep.subr.mxu0 0.0
    %40 = vmatpush1.msra.mxu0 0.0
    %41 = vmatprep.subr.mxu0 0.0
    %42 = vmatpush1.msra.mxu0 0.0
    %43 = vmatprep.subr.mxu0 0.0
    %44 = vmatpush1.msra.mxu0 0.0
    %45 = vmatprep.subr.mxu0 0.0
    %46 = vmatpush1.msra.mxu0 0.0
    %47 = vmatprep.subr.mxu0 0.0
    %48 = vmatpush1.msra.mxu0 0.0
    %49 = vmatprep.subr.mxu0 0.0
    %50 = vmatpush1.msra.mxu0 0.0
    %51 = vmatprep.subr.mxu0 0.0
    %52 = vmatpush1.msra.mxu0 0.0
    %53 = vmatprep.subr.mxu0 0.0
    %54 = vmatpush1.msra.mxu0 0.0
    %55 = vmatprep.subr.mxu0 0.0
    %56 = vmatpush1.msra.mxu0 0.0
    %57 = vmatprep.subr.mxu0 0.0
    %58 = vmatpush1.msra.mxu0 0.0
    %59 = vmatprep.subr.mxu0 0.0
    %60 = vmatpush1.msra.mxu0 0.0
    %61 = vmatprep.subr.mxu0 0.0
    %62 = vmatpush1.msra.mxu0 %v25
    %63 = vmatprep.subr.mxu0 0.0
    %64 = vmatpush1.msra.mxu0 %v24
    %65 = vmatprep.subr.mxu0 0.0
    %66 = vmatpush1.msra.mxu0 %v23
    %67 = vmatprep.subr.mxu0 0.0
    %68 = vmatpush1.msra.mxu0 %v22
    %69 = vmatprep.subr.mxu0 0.0
    %70 = vmatpush2.msra.mxu0 0.0
    %71 = vmatprep.subr.mxu0 0.0
    %72 = vmatpush2.msra.mxu0 0.0
    %73 = vmatprep.subr.mxu0 0.0
    %74 = vmatpush2.msra.mxu0 0.0
    %75 = vmatprep.subr.mxu0 0.0
    %76 = vmatpush2.msra.mxu0 0.0
    %77 = vmatprep.subr.mxu0 0.0
    %78 = vmatpush2.msra.mxu0 0.0
    %79 = vmatprep.subr.mxu0 0.0
    %80 = vmatpush2.msra.mxu0 0.0
    %81 = vmatprep.subr.mxu0 0.0
    %82 = vmatpush2.msra.mxu0 0.0
    %83 = vmatprep.subr.mxu0 0.0
    %84 = vmatpush2.msra.mxu0 0.0
    %85 = vmatprep.subr.mxu0 0.0
    %86 = vmatpush2.msra.mxu0 0.0
    %87 = vmatprep.subr.mxu0 0.0
    %88 = vmatpush2.msra.mxu0 0.0
    %89 = vmatprep.subr.mxu0 0.0
    %90 = vmatpush2.msra.mxu0 0.0
    %91 = vmatprep.subr.mxu0 0.0
    %92 = vmatpush2.msra.mxu0 0.0
    %93 = vmatprep.subr.mxu0 0.0
    %94 = vmatpush2.msra.mxu0 0.0
    %95 = vmatprep.subr.mxu0 0.0
    %96 = vmatpush2.msra.mxu0 0.0
    %97 = vmatprep.subr.mxu0 0.0
    %98 = vmatpush2.msra.mxu0 0.0
    %99 = vmatprep.subr.mxu0 0.0
    %100 = vmatpush2.msra.mxu0 0.0
    %101 = vmatprep.mubr.f32.mxu0 0.0
    %102 = vmatmul.mubr.f32.gmra.mxu0 %v35
    %v103 = vpop.f32.mrf.mxu0
    %v104 = vadd.f32 %v31, %v103
    %v105 = vpop.f32.mrf.mxu0
    %106 = vdwg.mxu0
    %v107 = vmul.f32 %v104, 0.5
    %v108 = vmul.f32 %v104, 0.70710677
    %v109 = verf.f32.pop %v108
    %v110 = vadd.f32 %v109, 1.0
    %v111 = vmul.f32 %v107, %v110
    %v112 = vld [vmem:[%s3] sm:$0xff]
    %v113 = vld [vmem:[%s3 + $0x8] sm:$0xff]
    %v114 = vld [vmem:[%s3 + $0x10] sm:$0xff]
    %v115 = vld [vmem:[%s3 + $0x18] sm:$0xff]
    %v116 = vld [vmem:[%s3 + $0x20] sm:$0xff]
    %v117 = vld [vmem:[%s3 + $0x28] sm:$0xff]
    %v118 = vld [vmem:[%s3 + $0x30] sm:$0xff]
    %v119 = vld [vmem:[%s3 + $0x38] sm:$0xff]
    %v120 = vld [vmem:[%s4] sm:$0x1]
    %v122 = vlaneseq
    %v123 = vshrl.u32 %v122, 7
    %v124 = vsub.s32 0, %v123
    %v125 = vrot.slane %v120, %v124
    %vm127 = vcmask 523264
    %v129 = vsel %vm127, %v111, 0
    %131 = vmatprep.subr.mxu0 0.0
    %132 = vmatpush1.msra.mxu0 0.0
    %133 = vmatprep.subr.mxu0 0.0
    %134 = vmatpush1.msra.mxu0 0.0
    %135 = vmatprep.subr.mxu0 0.0
    %136 = vmatpush1.msra.mxu0 0.0
    %137 = vmatprep.subr.mxu0 0.0
    %138 = vmatpush1.msra.mxu0 0.0
    %139 = vmatprep.subr.mxu0 0.0
    %140 = vmatpush1.msra.mxu0 0.0
    %141 = vmatprep.subr.mxu0 0.0
    %142 = vmatpush1.msra.mxu0 0.0
    %143 = vmatprep.subr.mxu0 0.0
    %144 = vmatpush1.msra.mxu0 0.0
    %145 = vmatprep.subr.mxu0 0.0
    %146 = vmatpush1.msra.mxu0 0.0
    %147 = vmatprep.subr.mxu0 0.0
    %148 = vmatpush1.msra.mxu0 %v119
    %149 = vmatprep.subr.mxu0 0.0
    %150 = vmatpush1.msra.mxu0 %v118
    %151 = vmatprep.subr.mxu0 0.0
    %152 = vmatpush1.msra.mxu0 %v117
    %153 = vmatprep.subr.mxu0 0.0
    %154 = vmatpush1.msra.mxu0 %v116
    %155 = vmatprep.subr.mxu0 0.0
    %156 = vmatpush1.msra.mxu0 %v115
    %157 = vmatprep.subr.mxu0 0.0
    %158 = vmatpush1.msra.mxu0 %v114
    %159 = vmatprep.subr.mxu0 0.0
    %160 = vmatpush1.msra.mxu0 %v113
    %161 = vmatprep.subr.mxu0 0.0
    %162 = vmatpush1.msra.mxu0 %v112
    %163 = vmatprep.subr.mxu0 0.0
    %164 = vmatpush2.msra.mxu0 0.0
    %165 = vmatprep.subr.mxu0 0.0
    %166 = vmatpush2.msra.mxu0 0.0
    %167 = vmatprep.subr.mxu0 0.0
    %168 = vmatpush2.msra.mxu0 0.0
    %169 = vmatprep.subr.mxu0 0.0
    %170 = vmatpush2.msra.mxu0 0.0
    %171 = vmatprep.subr.mxu0 0.0
    %172 = vmatpush2.msra.mxu0 0.0
    %173 = vmatprep.subr.mxu0 0.0
    %174 = vmatpush2.msra.mxu0 0.0
    %175 = vmatprep.subr.mxu0 0.0
    %176 = vmatpush2.msra.mxu0 0.0
    %177 = vmatprep.subr.mxu0 0.0
    %178 = vmatpush2.msra.mxu0 0.0
    %179 = vmatprep.subr.mxu0 0.0
    %180 = vmatpush2.msra.mxu0 0.0
    %181 = vmatprep.subr.mxu0 0.0
    %182 = vmatpush2.msra.mxu0 0.0
    %183 = vmatprep.subr.mxu0 0.0
    %184 = vmatpush2.msra.mxu0 0.0
    %185 = vmatprep.subr.mxu0 0.0
    %186 = vmatpush2.msra.mxu0 0.0
    %187 = vmatprep.subr.mxu0 0.0
    %188 = vmatpush2.msra.mxu0 0.0
    %189 = vmatprep.subr.mxu0 0.0
    %190 = vmatpush2.msra.mxu0 0.0
    %191 = vmatprep.subr.mxu0 0.0
    %192 = vmatpush2.msra.mxu0 0.0
    %193 = vmatprep.subr.mxu0 0.0
    %194 = vmatpush2.msra.mxu0 0.0
    %195 = vmatprep.mubr.f32.mxu0 0.0
    %196 = vmatmul.mubr.f32.gmra.mxu0 %v129
    %v197 = vpop.f32.mrf.mxu0
    %v198 = vadd.f32 %v125, %v197
    %v199 = vpop.f32.mrf.mxu0
    %200 = vdwg.mxu0
    %v201 = vmul.f32 %v198, 0.5
    %v202 = vmul.f32 %v198, 0.70710677
    %v203 = verf.f32.pop %v202
    %v204 = vadd.f32 %v203, 1.0
    %v205 = vmul.f32 %v201, %v204
    %206 = vst [vmem:[#allocation2] sm:$0xff] %v205
    // Predicated region
    $region22: #{mlp_head_apply.1} parent=1 // pred_check
      _
    $region23: #{mlp_head_apply.1} parent=1 // pred_check_branch
      %208 = sbr.rel (0) target = $region25
    $region24: #{mlp_head_apply.1} parent=1 // pred_region
      %s210 = ssub.s32 128, 128
      %211 = vsyncadd [#allocation3], %s210
      %s213 = sshll.u32 [#allocation2], 4
      %s214 = int_to_ptr.vmem [resolvable:$true] %s213
      %216 = dma.vmem_to_hbm [thread:$0]  %s214, 128, %s5, [#allocation3]
    $region25: #{mlp_head_apply.1} parent=1 // pred_fallthru
      _
    // Predicated region
    $region26: #{mlp_head_apply.1} parent=1 // pred_check
      _
    $region27: #{mlp_head_apply.1} parent=1 // pred_check_branch
      %218 = sbr.rel (0) target = $region29
    $region28: #{mlp_head_apply.1} parent=1 // pred_region
      %219 = dma.done [#allocation3], 128
    $region29: #{mlp_head_apply.1} parent=1 // pred_fallthru
      _
    %220 = vsyncpa [#allocation3], 1

</llo_original>
